<compile_context>
chip_gen: v5e
topology: v5e:2x2
jax: 0.10.0
libtpu: 0.0.40
codegen_flags: <defaults>
</compile_context>

<pallas_src>
import jax
import jax.numpy as jnp
from jax import lax
from jax.experimental import pallas as pl
from jax.experimental.pallas import tpu as pltpu

_EPS = 1e-8
_LANES = 128
_VMEM_LIMIT = 32 * 1024 * 1024          # safe scoped-VMEM on v5e/v6e/v7x
_PASS1_BLOCK_BYTES = 4 * 1024 * 1024    # input block budget for the reduction
_PASS2_BLOCK_BYTES = 2 * 1024 * 1024    # output block budget for the copy pass


def _cdiv(a, b):
    return -(-a // b)


def _rdown(a, b):
    return (a // b) * b


def _rup(a, b):
    return (-(-a // b)) * b


# ----------------------------------------------------------------------------
# Pass 1: group-wise std reduction over a lane-dense (G, M, S, 128) layout.
# ----------------------------------------------------------------------------
def _make_reduce_kernel(g, ts, nk, s_rows, needs_mask):
    inv_g = 1.0 / float(g)

    def kernel(x_ref, o_ref):
        # grid = (MT, P, nk); x_ref: (G, TM, TS, 128); o_ref: (1, TM, 128)
        k = pl.program_id(2)

        @pl.when(k == 0)
        def _init():
            o_ref[...] = jnp.zeros_like(o_ref)

        xv = x_ref[...].astype(jnp.float32)          # upcast on vregs (bf16 ok)
        s1 = jnp.sum(xv, axis=0)                     # (TM, TS, 128) sum_g x
        s2 = jnp.sum(xv * xv, axis=0)                # (TM, TS, 128) sum_g x^2
        mean = s1 * inv_g
        var = jnp.maximum(s2 * inv_g - mean * mean, 0.0)
        std = jnp.sqrt(var + _EPS)

        if needs_mask:
            # Ragged tail along the S (sublane-row) axis: zero OOB rows so the
            # partial / duplicated last tiles contribute nothing.
            p = pl.program_id(1)
            start = (p * nk + k) * ts
            rows = lax.broadcasted_iota(jnp.int32, std.shape, 1) + start
            std = jnp.where(rows < s_rows, std, 0.0)

        o_ref[...] += jnp.sum(std, axis=1)[None]     # lane-dense partial sums

    return kernel


def _mbstd_stats(x, group_size):
    """stat: (M,) float32 with stat[m] = mean_{C,H,W} std over the group."""
    N, C, H, W = x.shape
    G = min(group_size, N)
    assert N % G == 0, "batch must be divisible by the (clamped) group size"
    M = N // G
    F = C * H * W
    itemsize = jnp.dtype(x.dtype).itemsize

    x3 = x.reshape(G, M, F)

    # Lane-dense layout: feature axis -> (S sublane-rows, 128 lanes).
    S = _cdiv(F, _LANES)
    F128 = S * _LANES
    pad_lanes = F128 - F
    if pad_lanes:
        # TODO(synk): rare ragged case (F % 128 != 0) still pays one HBM copy of
        # x; zero pad lanes contribute exactly sqrt(eps) each, corrected below.
        x3 = jnp.pad(x3, ((0, 0), (0, 0), (0, pad_lanes)))
    x4 = x3.reshape(G, M, S, _LANES)

    # --- M tiling so block bytes do not scale with very large N (v7x VMEM).
    if G * M * 8 * _LANES * itemsize <= _PASS1_BLOCK_BYTES or M <= 8:
        TM = M
    else:
        TM = max(8, _rdown(_PASS1_BLOCK_BYTES // (G * 8 * _LANES * itemsize), 8))
        TM = min(TM, _rdown(M, 8))
    MT = _cdiv(M, TM)

    # --- core split over the feature axis, decided BEFORE sizing TS.
    P = 2 if S >= 16 else 1
    Sp = _cdiv(S, P)                                  # sublane-rows per core

    # --- TS sized for ~4 MiB native-dtype input blocks.
    ts_budget = max(8, _rdown(_PASS1_BLOCK_BYTES // (G * TM * _LANES * itemsize), 8))
    if P == 1:
        TS = S if S <= 8 else min(ts_budget, _rdown(S, 8))
    else:
        TS = min(ts_budget, _rup(Sp, 8))              # guaranteed <= S (S >= 16)
    nk = _cdiv(Sp, TS)

    n_blocks = _cdiv(S, TS)
    needs_mask = (P * nk * TS != S)

    if P * nk <= n_blocks:
        x_map = lambda mi, p, k: (0, mi, p * nk + k, 0)
    else:
        # Some logical tiles fall past the array; clamp the DMA to the last
        # valid block (the in-kernel mask zeroes their contribution).
        last = n_blocks - 1
        x_map = lambda mi, p, k: (0, mi, jnp.minimum(p * nk + k, last), 0)

    partial = pl.pallas_call(
        _make_reduce_kernel(G, TS, nk, S, needs_mask),
        out_shape=jax.ShapeDtypeStruct((P, M, _LANES), jnp.float32),
        grid=(MT, P, nk),
        in_specs=[pl.BlockSpec((G, TM, TS, _LANES), x_map)],
        out_specs=pl.BlockSpec((1, TM, _LANES), lambda mi, p, k: (p, mi, 0)),
        compiler_params=pltpu.CompilerParams(
            dimension_semantics=("parallel", "parallel", "arbitrary"),
            vmem_limit_bytes=_VMEM_LIMIT,
        ),
    )(x4)

    # Tiny epilogue: cross-core / cross-lane reduce, pad correction, final mean.
    sums = jnp.sum(partial, axis=(0, 2))                       # (M,)
    if pad_lanes:
        sums = sums - jnp.float32(pad_lanes) * jnp.sqrt(jnp.float32(_EPS))
    stat = sums / jnp.float32(F)
    return stat, G, M


# ----------------------------------------------------------------------------
# Pass 2: fused "copy x + append stat channel" over flat, lane-dense blocks.
# ----------------------------------------------------------------------------
def _make_concat_kernel(feat, hw):
    def kernel(x_ref, s_ref, o_ref):
        # x_ref: (TN, feat); s_ref: (TN, 1) f32; o_ref: (TN, feat + hw)
        o_ref[:, :feat] = x_ref[...]
        sv = s_ref[...]
        o_ref[:, feat:] = jnp.broadcast_to(sv, (sv.shape[0], hw)).astype(o_ref.dtype)

    return kernel


def minibatch_std_layer(x, group_size=4):
    """Equivalent of MinibatchStdLayer.forward(x, group_size). x: (N, C, H, W)."""
    N, C, H, W = x.shape
    HW = H * W
    F = C * HW
    itemsize = jnp.dtype(x.dtype).itemsize

    stat, G, M = _mbstd_stats(x, group_size)

    # batch index n = g*M + m picks stat[n % M] (same as torch .repeat order)
    stat_n = jnp.tile(stat, (G,)).astype(jnp.float32)           # (N,)
    stat_col = stat_n[:, None]                                  # (N, 1)

    x2 = x.reshape(N, F)

    row_bytes = (F + HW) * itemsize
    TN = max(1, _PASS2_BLOCK_BYTES // row_bytes)
    if N >= 16:
        TN = min(TN, _cdiv(N, 2))        # keep >= 2 grid steps for megacore
    if TN >= N:
        TN = N
    else:
        TN = min(max(8, _rdown(TN, 8)), N)
    gn = _cdiv(N, TN)

    out2 = pl.pallas_call(
        _make_concat_kernel(F, HW),
        out_shape=jax.ShapeDtypeStruct((N, F + HW), x.dtype),
        grid=(gn,),
        in_specs=[pl.BlockSpec((TN, F), lambda i: (i, 0)),
                  pl.BlockSpec((TN, 1), lambda i: (i, 0))],
        out_specs=pl.BlockSpec((TN, F + HW), lambda i: (i, 0)),
        compiler_params=pltpu.CompilerParams(
            dimension_semantics=("parallel",),
            vmem_limit_bytes=_VMEM_LIMIT,
        ),
    )(x2, stat_col)
    return out2.reshape(N, C + 1, H, W)


# ----------------------------------------------------------------------------
# Pure-JAX reference mirroring the PyTorch module exactly.
# ----------------------------------------------------------------------------
def _reference(x, group_size=4):
    N, C, H, W = x.shape
    G = min(group_size, N)
    y = x.reshape(G, -1, C, H, W).astype(jnp.float32)
    y = y - jnp.mean(y, axis=0, keepdims=True)
    y = jnp.mean(y ** 2, axis=0)
    y = jnp.sqrt(y + 1e-8)
    y = jnp.mean(y, axis=(1, 2, 3), keepdims=True)              # (M,1,1,1)
    y = jnp.tile(y, (G, 1, H, W)).astype(x.dtype)               # (N,1,H,W)
    return jnp.concatenate([x, y], axis=1)


if __name__ == "__main__":
    key = jax.random.PRNGKey(0)
    N, C, H, W = 8, 4, 16, 16            # group_size=4 -> G=4, M=2, F=1024
    x = jax.random.normal(key, (N, C, H, W), dtype=jnp.float32)

    fwd = jax.jit(lambda v: minibatch_std_layer(v, group_size=4))
    out = jax.block_until_ready(fwd(x))

    ref = _reference(x, group_size=4)
    assert out.shape == (N, C + 1, H, W), out.shape
    assert jnp.allclose(out, ref, atol=1e-5, rtol=1e-5), \
        float(jnp.max(jnp.abs(out.astype(jnp.float32) - ref.astype(jnp.float32))))
    print("KERNEL_OK")
</pallas_src>

<mosaic_0001>
module attributes {stable_mosaic.version = 11 : i64} {
  func.func @kernel(%arg0: i32, %arg1: i32, %arg2: i32, %arg3: memref<4x2x8x128xf32, #tpu.memory_space<vmem>>, %arg4: memref<1x2x128xf32, #tpu.memory_space<vmem>>) attributes {dimension_semantics = [#tpu.dimension_semantics<parallel>, #tpu.dimension_semantics<parallel>, #tpu.dimension_semantics<arbitrary>], iteration_bounds = array<i64: 1, 1, 1>, scalar_prefetch = 0 : i64, scratch_operands = 0 : i64, tpu.core_type = #tpu.core_type<tc>, window_params = [{transform_indices = @transform_0, window_bounds = array<i64: 4, 2, 8, 128>}, {transform_indices = @transform_1, window_bounds = array<i64: 1, 2, 128>}]} {
    %c0_i32 = arith.constant 0 : i32
    %0 = arith.cmpi eq, %arg2, %c0_i32 : i32
    %1 = arith.extui %0 : i1 to i32
    %c0_i32_0 = arith.constant 0 : i32
    %2 = arith.cmpi ne, %1, %c0_i32_0 : i32
    scf.if %2 {
      %cst_16 = arith.constant 0.000000e+00 : f32
      %23 = vector.broadcast %cst_16 : f32 to vector<1x2x128xf32>
      %c0_17 = arith.constant 0 : index
      %c0_18 = arith.constant 0 : index
      %c0_19 = arith.constant 0 : index
      %24 = vector.load %arg4[%c0_17, %c0_18, %c0_19] : memref<1x2x128xf32, #tpu.memory_space<vmem>>, vector<1x2x128xf32>
      tpu.vector_store %arg4[%c0_17, %c0_18, %c0_19], %23 {strides = array<i32>} : memref<1x2x128xf32, #tpu.memory_space<vmem>>, vector<1x2x128xf32>,
    } else {
    }
    %c0 = arith.constant 0 : index
    %c0_1 = arith.constant 0 : index
    %c0_2 = arith.constant 0 : index
    %c0_3 = arith.constant 0 : index
    %3 = vector.load %arg3[%c0, %c0_1, %c0_2, %c0_3] : memref<4x2x8x128xf32, #tpu.memory_space<vmem>>, vector<4x2x8x128xf32>
    %cst = arith.constant dense<0.000000e+00> : vector<2x8x128xf32>
    %4 = vector.multi_reduction <add>, %3, %cst [0] : vector<4x2x8x128xf32> to vector<2x8x128xf32>
    %5 = arith.mulf %3, %3 : vector<4x2x8x128xf32>
    %cst_4 = arith.constant dense<0.000000e+00> : vector<2x8x128xf32>
    %6 = vector.multi_reduction <add>, %5, %cst_4 [0] : vector<4x2x8x128xf32> to vector<2x8x128xf32>
    %cst_5 = arith.constant 2.500000e-01 : f32
    %7 = vector.broadcast %cst_5 : f32 to vector<2x8x128xf32>
    %8 = arith.mulf %4, %7 : vector<2x8x128xf32>
    %cst_6 = arith.constant 2.500000e-01 : f32
    %9 = vector.broadcast %cst_6 : f32 to vector<2x8x128xf32>
    %10 = arith.mulf %6, %9 : vector<2x8x128xf32>
    %11 = arith.mulf %8, %8 : vector<2x8x128xf32>
    %12 = arith.subf %10, %11 : vector<2x8x128xf32>
    %cst_7 = arith.constant 0.000000e+00 : f32
    %13 = vector.broadcast %cst_7 : f32 to vector<2x8x128xf32>
    %14 = arith.maximumf %12, %13 : vector<2x8x128xf32>
    %cst_8 = arith.constant 9.99999993E-9 : f32
    %15 = vector.broadcast %cst_8 : f32 to vector<2x8x128xf32>
    %16 = arith.addf %14, %15 : vector<2x8x128xf32>
    %17 = math.sqrt %16 : vector<2x8x128xf32>
    %c0_9 = arith.constant 0 : index
    %c0_10 = arith.constant 0 : index
    %c0_11 = arith.constant 0 : index
    %18 = vector.load %arg4[%c0_9, %c0_10, %c0_11] : memref<1x2x128xf32, #tpu.memory_space<vmem>>, vector<1x2x128xf32>
    %cst_12 = arith.constant dense<0.000000e+00> : vector<2x128xf32>
    %19 = vector.multi_reduction <add>, %17, %cst_12 [1] : vector<2x8x128xf32> to vector<2x128xf32>
    %20 = vector.shape_cast %19 : vector<2x128xf32> to vector<1x2x128xf32>
    %21 = arith.addf %18, %20 : vector<1x2x128xf32>
    %c0_13 = arith.constant 0 : index
    %c0_14 = arith.constant 0 : index
    %c0_15 = arith.constant 0 : index
    %22 = vector.load %arg4[%c0_13, %c0_14, %c0_15] : memref<1x2x128xf32, #tpu.memory_space<vmem>>, vector<1x2x128xf32>
    tpu.vector_store %arg4[%c0_13, %c0_14, %c0_15], %21 {strides = array<i32>} : memref<1x2x128xf32, #tpu.memory_space<vmem>>, vector<1x2x128xf32>,
    return
  }
  func.func @transform_0(%arg0: i32, %arg1: i32, %arg2: i32) -> (i32, i32, i32, i32) {
    %c1_i32 = arith.constant 1 : i32
    %0 = arith.muli %arg1, %c1_i32 : i32
    %1 = arith.addi %0, %arg2 : i32
    %c0_i32 = arith.constant 0 : i32
    %c0_i32_0 = arith.constant 0 : i32
    %c0_i32_1 = arith.constant 0 : i32
    return %c0_i32, %arg0, %1, %c0_i32_0 : i32, i32, i32, i32
  }
  func.func @transform_1(%arg0: i32, %arg1: i32, %arg2: i32) -> (i32, i32, i32) {
    %c0_i32 = arith.constant 0 : i32
    %c0_i32_0 = arith.constant 0 : i32
    return %arg1, %arg0, %c0_i32 : i32, i32, i32
  }
}

module attributes {stable_mosaic.version = 11 : i64} {
  func.func @kernel(%arg0: i32, %arg1: memref<8x1024xf32, #tpu.memory_space<vmem>>, %arg2: memref<8x1xf32, #tpu.memory_space<vmem>>, %arg3: memref<8x1280xf32, #tpu.memory_space<vmem>>) attributes {dimension_semantics = [#tpu.dimension_semantics<parallel>], iteration_bounds = array<i64: 1>, scalar_prefetch = 0 : i64, scratch_operands = 0 : i64, tpu.core_type = #tpu.core_type<tc>, window_params = [{transform_indices = @transform_0, window_bounds = array<i64: 8, 1024>}, {transform_indices = @transform_1, window_bounds = array<i64: 8, 1>}, {transform_indices = @transform_2, window_bounds = array<i64: 8, 1280>}]} {
    %c0 = arith.constant 0 : index
    %c0_0 = arith.constant 0 : index
    %0 = vector.load %arg1[%c0, %c0_0] : memref<8x1024xf32, #tpu.memory_space<vmem>>, vector<8x1024xf32>
    %c0_1 = arith.constant 0 : index
    %c0_2 = arith.constant 0 : index
    %1 = vector.load %arg3[%c0_1, %c0_2] : memref<8x1280xf32, #tpu.memory_space<vmem>>, vector<8x1024xf32>
    tpu.vector_store %arg3[%c0_1, %c0_2], %0 {strides = array<i32>} : memref<8x1280xf32, #tpu.memory_space<vmem>>, vector<8x1024xf32>,
    %c0_3 = arith.constant 0 : index
    %c0_4 = arith.constant 0 : index
    %2 = vector.load %arg2[%c0_3, %c0_4] : memref<8x1xf32, #tpu.memory_space<vmem>>, vector<8x1xf32>
    %3 = vector.shape_cast %2 : vector<8x1xf32> to vector<8x1xf32>
    %4 = vector.broadcast %3 : vector<8x1xf32> to vector<8x256xf32>
    %c0_5 = arith.constant 0 : index
    %c1024 = arith.constant 1024 : index
    %5 = vector.load %arg3[%c0_5, %c1024] : memref<8x1280xf32, #tpu.memory_space<vmem>>, vector<8x256xf32>
    tpu.vector_store %arg3[%c0_5, %c1024], %4 {strides = array<i32>} : memref<8x1280xf32, #tpu.memory_space<vmem>>, vector<8x256xf32>,
    return
  }
  func.func @transform_0(%arg0: i32) -> (i32, i32) {
    %c0_i32 = arith.constant 0 : i32
    %c0_i32_0 = arith.constant 0 : i32
    return %arg0, %c0_i32 : i32, i32
  }
  func.func @transform_1(%arg0: i32) -> (i32, i32) {
    %c0_i32 = arith.constant 0 : i32
    %c0_i32_0 = arith.constant 0 : i32
    return %arg0, %c0_i32 : i32, i32
  }
  func.func @transform_2(%arg0: i32) -> (i32, i32) {
    %c0_i32 = arith.constant 0 : i32
    %c0_i32_0 = arith.constant 0 : i32
    return %arg0, %c0_i32 : i32, i32
  }
}

</mosaic_0001>

<llo_original>
// kernel: tile.8
$region0: #{tile.8}
  #allocation0 [shape = 's32[1]{0}', space=sflag, size = 0x4, scoped, tag = 'scoped memory for tile.8']
  %s0 = inlined_call_operand.vmem [shape: f32[2], index: 0, kind: input, shape index: {}]
  %s1 = inlined_call_operand.vmem [shape: f32[4,2], index: 1, kind: output, shape index: {}]
  // Predicated region
  $region2: #{tile.8} parent=0 // pred_check
    _
  $region3: #{tile.8} parent=0 // pred_check_branch
    %3 = sbr.rel (0) target = $region5
  $region4: #{tile.8} parent=0 // pred_region
    _
  $region5: #{tile.8} parent=0 // pred_fallthru
    _
  %v4 = vld [vmem:[%s0] ss:$0 sm:$0xff]
  %5 = vst [vmem:[%s1] sm:$0xf] %v4

// kernel: tile.0
$region0: #{tile.0}
  %s0 = inlined_call_operand.vmem [shape: f32[4,2], index: 0, kind: input, shape index: {}]
  %s1 = inlined_call_operand.vmem [shape: f32[8,1], index: 1, kind: output, shape index: {}]
  $region1: #{tile.0} parent=0
    #allocation0 [shape = 'u8[4096]{0}', space=vmem, size = 0x1000, scoped, tag = 'scoped mem for input reshape']
    %s3 = ssub.s32 16, 1
    %v4 = vld [vmem:[%s0] sm:%s3]
    %5 = vst [vmem:[#allocation0] sm:%s3] %v4
    %v6 = vld [vmem:[#allocation0] sm:$0xf]
    %vm7 = vcmask 7168
    %8 = vst.msk [vmem:[%s1] ss:$2 sm:$0xf] %vm7, %v6
    %v9 = vld [vmem:[#allocation0] sm:$0xf]
    %10 = vrot.lane.b32.xlu0 %v9, 127
    %v11 = vpop.permute.xlu0 %10
    %vm12 = vcmask 7168
    %s13 = scalar_lea.vmem %s1, 1
    %14 = vst.msk [vmem:[%s13] ss:$2 sm:$0xf] %vm12, %v11

// kernel: _lambda_.2
$region0: #{_lambda_.2}
  #allocation0 [shape = 'u32[]', space=smem, size = 0x4, offset = 0x4, fixed_abs, tag = 'smem constant byte address 0x4 - core index']
  #allocation1 [shape = 'u32[72,128]{1,0:T(1,128)}', space=vmem, size = 0x9000, scoped, tag = 'internal scratch']
  %s0 = inlined_call_operand.vmem [shape: f32[4,2,8,128], index: 0, kind: input, shape index: {}]
  %s1 = inlined_call_operand.vmem [shape: f32[1,2,128], index: 1, kind: output, shape index: {}]
  %s2 = sld [smem:[#allocation0]]
  $region18: #{_lambda_.2} parent=0
    _
  %s4 = ssub.s32 1, %s2
  %s5 = scalar_select 0, %s4, %s2
  // Predicated region
  $region2: #{_lambda_.2} parent=0 // pred_check
    _
  $region3: #{_lambda_.2} parent=0 // pred_check_branch
    %7 = sbr.rel (0) target = $region5
  $region4: #{_lambda_.2} parent=0 // pred_region
    %s8 = sadd.s32 0, 0
    %p9 = scmp.lt.s32.totalorder %s8, 0
    %s10 = scalar_select %p9, %s8, 0
    %s11 = smul.addr %s10, 8
    %s12 = scalar_lea.vmem %s0, %s11
    %s13 = sadd.s32 0, 0
  $region5: #{_lambda_.2} parent=0 // pred_fallthru
    _
  %s14 = sadd.s32 0, 0
  %p15 = scmp.lt.s32.totalorder %s14, 0
  %s16 = scalar_select %p15, %s14, 0
  %s17 = smul.addr %s16, 8
  %s18 = scalar_lea.vmem %s0, %s17
  %s19 = sadd.s32 0, 0
  %p20 = scmp.lt.s32.totalorder %s19, 0
  %s21 = scalar_select %p20, %s19, 0
  %s22 = smul.addr %s21, 8
  %s23 = scalar_lea.vmem %s0, %s22
  %s24 = sadd.s32 0, 0
  %p25 = scmp.eq.s32.totalorder 0, 0
  // Predicated region
  $region6: #{_lambda_.2} parent=0 // pred_check
    %p26 = pneg %p25
  $region7: #{_lambda_.2} parent=0 // pred_check_branch
    %28 = sbr.rel (%p26) target = $region9
  $region8: #{_lambda_.2} parent=0 // pred_region
    %29 = vst [vmem:[%s1] sm:$0x3] 0.0
  $region9: #{_lambda_.2} parent=0 // pred_fallthru
    _
  %v30 = vld [vmem:[%s23] sm:$0xff]
  %v31 = vld [vmem:[%s23 + $0x8] sm:$0xff]
  %v32 = vld [vmem:[%s23 + $0x10] sm:$0xff]
  %v33 = vld [vmem:[%s23 + $0x18] sm:$0xff]
  %v34 = vld [vmem:[%s23 + $0x20] sm:$0xff]
  %v35 = vld [vmem:[%s23 + $0x28] sm:$0xff]
  %v36 = vld [vmem:[%s23 + $0x30] sm:$0xff]
  %v37 = vld [vmem:[%s23 + $0x38] sm:$0xff]
  %v38 = vadd.f32 %v30, %v32
  %v39 = vadd.f32 %v38, %v34
  %v40 = vadd.f32 %v39, %v36
  %v41 = vadd.f32 %v31, %v33
  %v42 = vadd.f32 %v41, %v35
  %v43 = vadd.f32 %v42, %v37
  %v44 = vmul.f32 %v30, %v30
  %v45 = vmul.f32 %v31, %v31
  %v46 = vmul.f32 %v32, %v32
  %v47 = vmul.f32 %v33, %v33
  %v48 = vmul.f32 %v34, %v34
  %v49 = vmul.f32 %v35, %v35
  %v50 = vmul.f32 %v36, %v36
  %v51 = vmul.f32 %v37, %v37
  %v52 = vadd.f32 %v44, %v46
  %v53 = vadd.f32 %v52, %v48
  %v54 = vadd.f32 %v53, %v50
  %v55 = vadd.f32 %v45, %v47
  %v56 = vadd.f32 %v55, %v49
  %v57 = vadd.f32 %v56, %v51
  %v58 = vmul.f32 %v40, 0.25
  %v59 = vmul.f32 %v43, 0.25
  %v60 = vmul.f32 %v54, 0.25
  %v61 = vmul.f32 %v57, 0.25
  %v62 = vmul.f32 %v58, %v58
  %v63 = vmul.f32 %v59, %v59
  %v64 = vsub.f32 %v60, %v62
  %v65 = vsub.f32 %v61, %v63
  %v66 = vmax.f32 %v64, 0.0
  %v67 = vmax.f32 %v65, 0.0
  %v68 = vadd.f32 %v66, 1e-08
  %v69 = vadd.f32 %v67, 1e-08
  %v70 = vrsqrt.pop %v68
  %v71 = vmul.f32 %v70, %v68
  %v72 = vmul.f32 %v71, %v70
  %v73 = vmul.f32 0.5, %v72
  %v74 = vsub.f32 1.5, %v73
  %v75 = vmul.f32 %v70, %v74
  %v76 = vmul.f32 %v68, %v75
  %vm77 = vcmp.eq.f32.partialorder %v68, inf
  %v78 = vsel %vm77, %v68, %v76
  %vm79 = vcmp.eq.f32.partialorder %v68, 0.0
  %v80 = vand.u32 %v68, 2147483648
  %v81 = vsel %vm79, %v80, %v78
  %v82 = vrsqrt.pop %v69
  %v83 = vmul.f32 %v82, %v69
  %v84 = vmul.f32 %v83, %v82
  %v85 = vmul.f32 0.5, %v84
  %v86 = vsub.f32 1.5, %v85
  %v87 = vmul.f32 %v82, %v86
  %v88 = vmul.f32 %v69, %v87
  %vm89 = vcmp.eq.f32.partialorder %v69, inf
  %v90 = vsel %vm89, %v69, %v88
  %vm91 = vcmp.eq.f32.partialorder %v69, 0.0
  %v92 = vand.u32 %v69, 2147483648
  %v93 = vsel %vm91, %v92, %v90
  %v94 = vld [vmem:[%s1] sm:$0x3]
  %v95 = vrot.slane %v81, 4
  %v96 = vadd.f32 %v81, %v95
  %v97 = vrot.slane %v96, 2
  %v98 = vadd.f32 %v96, %v97
  %v99 = vrot.slane %v98, 1
  %v100 = vadd.f32 %v98, %v99
  %v101 = vrot.slane %v93, 4
  %v102 = vadd.f32 %v93, %v101
  %v103 = vrot.slane %v102, 2
  %v104 = vadd.f32 %v102, %v103
  %v105 = vrot.slane %v104, 1
  %v106 = vadd.f32 %v104, %v105
  %vm109 = vcmask 1041409
  %v110 = vsel %vm109, %v106, %v100
  %v112 = vadd.f32 %v94, %v110
  %113 = vst [vmem:[%s1] sm:$0x3] %v112
  // Predicated region
  $region10: #{_lambda_.2} parent=0 // pred_check
    _
  $region11: #{_lambda_.2} parent=0 // pred_check_branch
    %115 = sbr.rel (0) target = $region13
  $region12: #{_lambda_.2} parent=0 // pred_region
    _
  $region13: #{_lambda_.2} parent=0 // pred_fallthru
    _
  // Predicated region
  $region14: #{_lambda_.2} parent=0 // pred_check
    _
  $region15: #{_lambda_.2} parent=0 // pred_check_branch
    %117 = sbr.rel (0) target = $region17
  $region16: #{_lambda_.2} parent=0 // pred_region
    _
  $region17: #{_lambda_.2} parent=0 // pred_fallthru
    _

// kernel: _lambda_.3
$region0: #{_lambda_.3}
  #allocation0 [shape = 'u32[]', space=smem, size = 0x4, offset = 0x4, fixed_abs, tag = 'smem constant byte address 0x4 - core index']
  #allocation1 [shape = 'u32[72,128]{1,0:T(1,128)}', space=vmem, size = 0x9000, scoped, tag = 'internal scratch']
  %s0 = inlined_call_operand.vmem [shape: f32[8,1024], index: 0, kind: input, shape index: {}]
  %s1 = inlined_call_operand.vmem [shape: f32[8,1], index: 1, kind: input, shape index: {}]
  %s2 = inlined_call_operand.vmem [shape: f32[8,1280], index: 2, kind: output, shape index: {}]
  %s3 = sld [smem:[#allocation0]]
  $region18: #{_lambda_.3} parent=0
    _
  %s5 = ssub.s32 1, %s3
  %s6 = scalar_select 0, %s5, %s3
  // Predicated region
  $region2: #{_lambda_.3} parent=0 // pred_check
    _
  $region3: #{_lambda_.3} parent=0 // pred_check_branch
    %8 = sbr.rel (0) target = $region5
  $region4: #{_lambda_.3} parent=0 // pred_region
    _
  $region5: #{_lambda_.3} parent=0 // pred_fallthru
    _
  // Predicated region
  $region6: #{_lambda_.3} parent=0 // pred_check
    _
  $region7: #{_lambda_.3} parent=0 // pred_check_branch
    %10 = sbr.rel (0) target = $region9
  $region8: #{_lambda_.3} parent=0 // pred_region
    _
  $region9: #{_lambda_.3} parent=0 // pred_fallthru
    _
  %v11 = vld [vmem:[%s0] sm:$0xff]
  %v12 = vld [vmem:[%s0 + $0x8] sm:$0xff]
  %v13 = vld [vmem:[%s0 + $0x10] sm:$0xff]
  %v14 = vld [vmem:[%s0 + $0x18] sm:$0xff]
  %v15 = vld [vmem:[%s0 + $0x20] sm:$0xff]
  %v16 = vld [vmem:[%s0 + $0x28] sm:$0xff]
  %v17 = vld [vmem:[%s0 + $0x30] sm:$0xff]
  %v18 = vld [vmem:[%s0 + $0x38] sm:$0xff]
  %19 = vst [vmem:[%s2] sm:$0xff] %v11
  %20 = vst [vmem:[%s2 + $0x8] sm:$0xff] %v12
  %21 = vst [vmem:[%s2 + $0x10] sm:$0xff] %v13
  %22 = vst [vmem:[%s2 + $0x18] sm:$0xff] %v14
  %23 = vst [vmem:[%s2 + $0x20] sm:$0xff] %v15
  %24 = vst [vmem:[%s2 + $0x28] sm:$0xff] %v16
  %25 = vst [vmem:[%s2 + $0x30] sm:$0xff] %v17
  %26 = vst [vmem:[%s2 + $0x38] sm:$0xff] %v18
  %v27 = vld [vmem:[%s1] sm:$0xff]
  %29 = vset.pattern.permute.xlu0 0
  %30 = vperm.xlu0 %29, %v27
  %v31 = vpop.permute.xlu0 %30
  %33 = vst [vmem:[%s2 + $0x40] sm:$0xff] %v31
  %34 = vst [vmem:[%s2 + $0x48] sm:$0xff] %v31
  // Predicated region
  $region10: #{_lambda_.3} parent=0 // pred_check
    _
  $region11: #{_lambda_.3} parent=0 // pred_check_branch
    %36 = sbr.rel (0) target = $region13
  $region12: #{_lambda_.3} parent=0 // pred_region
    _
  $region13: #{_lambda_.3} parent=0 // pred_fallthru
    _
  // Predicated region
  $region14: #{_lambda_.3} parent=0 // pred_check
    _
  $region15: #{_lambda_.3} parent=0 // pred_check_branch
    %38 = sbr.rel (0) target = $region17
  $region16: #{_lambda_.3} parent=0 // pred_region
    _
  $region17: #{_lambda_.3} parent=0 // pred_fallthru
    _

</llo_original>
